<compile_context>
chip_gen: v5e
topology: v5e:2x2
jax: 0.10.0
libtpu: 0.0.40
codegen_flags: <defaults>
</compile_context>

<pallas_src>
import jax
import jax.numpy as jnp
from jax import lax
from jax.experimental import pallas as pl
from jax.experimental.pallas import tpu as pltpu


_VMEM_LIMIT_BYTES = 48 * 1024 * 1024   # scoped-VMEM request: safe on v5e/v6e/v7x
_VMEM_X_BUDGET = 40 * 1024 * 1024      # tiling budget (headroom for compiler temps)


def _round_up(x, m):
    return (x + m - 1) // m * m


def _choose_tile_b(batch, input_size, h1, h2):
    """Largest lane-dense batch tile (multiple of 128) whose total VMEM
    footprint fits the budget.  VMEM cost uses lane/sublane-PADDED shapes:
    input_size pads to a multiple of 128 on the lane axis in VMEM even though
    the HBM DMA stays contiguous and unpadded."""
    lanes_in = _round_up(max(input_size, 1), 128)
    sub_h1 = _round_up(h1, 8)
    sub_h2 = _round_up(h2, 8)
    # Per batch-row f32 bytes:
    #   2 pipelined x buffers           : lanes_in each
    #   2 pipelined output buffers      : 8 sublanes each
    #   live activations h1/h2/logits   : sublane-padded, x2 slack for temps
    per_row = 4 * (2 * lanes_in + 2 * 8 + 2 * (sub_h1 + sub_h2 + 8))
    cap = _VMEM_X_BUDGET // per_row
    cap = max(128, (cap // 128) * 128)
    need = _round_up(batch, 128)
    tile_b = min(cap, need)
    # v7x megacore: guarantee >= 2 grid steps when the batch allows it so the
    # "parallel" axis can actually be split across both TensorCores.
    if need >= 256 and tile_b >= need:
        tile_b = _round_up(pl.cdiv(need, 2), 128)
    return int(tile_b)


def _mlp_kernel(x_ref, w1_ref, b1_ref, w2_ref, b2_ref, w3_ref, b3_ref, o_ref):
    # x_ref: (TILE_B, input_size) f32 -- natural layout, contiguous HBM reads.
    # Weights are in PyTorch layout (out_features, in_features); biases are
    # column vectors (out_features, 1) that broadcast along the lane axis.
    x = x_ref[...]

    # Contract over the feature axis: (h1, in) x (TILE_B, in)^T -> (h1, TILE_B).
    a1 = lax.dot_general(
        w1_ref[...], x,
        dimension_numbers=(((1,), (1,)), ((), ())),
        preferred_element_type=jnp.float32) + b1_ref[...]
    a1 = jnp.maximum(a1, 0.0)                                  # ReLU (h1, TILE_B)

    a2 = jnp.dot(w2_ref[...], a1,
                 preferred_element_type=jnp.float32) + b2_ref[...]
    a2 = jnp.maximum(a2, 0.0)                                  # ReLU (h2, TILE_B)

    logits = jnp.dot(w3_ref[...], a2,
                     preferred_element_type=jnp.float32) + b3_ref[...]
    # Exact sigmoid: exp on the EUP, exact divide -> result stays in [0, 1].
    o_ref[...] = 1.0 / (1.0 + jnp.exp(-logits))                # (1, TILE_B)


@jax.jit
def neural_network_forward(x, params):
    """Fused MLP forward. x: (batch, input_size) f32. Returns (batch,), matching
    the PyTorch module's `.squeeze(-1)` output."""
    w1, b1, w2, b2, w3, b3 = params
    batch, input_size = x.shape
    h1 = w1.shape[0]
    h2 = w2.shape[0]

    tile_b = _choose_tile_b(batch, input_size, h1, h2)

    # Pad the batch only to lane granularity (128), never to a tile_b multiple.
    # When batch is already a multiple of 128 this is a no-op (no extra HBM pass).
    padded = _round_up(batch, 128)
    if padded != batch:
        x = jnp.pad(x, ((0, padded - batch), (0, 0)))
    n_tiles = pl.cdiv(padded, tile_b)   # ragged final block handled by Pallas

    const = lambda shape: pl.BlockSpec(shape, lambda i: (0, 0))

    out = pl.pallas_call(
        _mlp_kernel,
        out_shape=jax.ShapeDtypeStruct((1, padded), jnp.float32),
        grid=(n_tiles,),
        in_specs=[
            pl.BlockSpec((tile_b, input_size), lambda i: (i, 0)),   # x (pipelined, contiguous)
            const((h1, input_size)),                                # w1 (resident)
            const((h1, 1)),                                         # b1
            const((h2, h1)),                                        # w2
            const((h2, 1)),                                         # b2
            const((1, h2)),                                         # w3
            const((1, 1)),                                          # b3
        ],
        out_specs=pl.BlockSpec((1, tile_b), lambda i: (0, i)),      # lane-dense output
        compiler_params=pltpu.CompilerParams(
            dimension_semantics=("parallel",),
            vmem_limit_bytes=_VMEM_LIMIT_BYTES),
    )(x, w1, b1, w2, b2, w3, b3)

    return out[0, :batch]


def init_params(key, input_size, h1=20, h2=20):
    """PyTorch nn.Linear-style init (uniform +-1/sqrt(fan_in)).
    Weights in PyTorch layout (out, in); biases as column vectors (out, 1)."""
    ks = jax.random.split(key, 6)

    def linear(kw, kb, fan_in, fan_out):
        bound = 1.0 / jnp.sqrt(jnp.float32(fan_in))
        w = jax.random.uniform(kw, (fan_out, fan_in), jnp.float32, -bound, bound)
        b = jax.random.uniform(kb, (fan_out, 1), jnp.float32, -bound, bound)
        return w, b

    w1, b1 = linear(ks[0], ks[1], input_size, h1)
    w2, b2 = linear(ks[2], ks[3], h1, h2)
    w3, b3 = linear(ks[4], ks[5], h2, 1)
    return (w1, b1, w2, b2, w3, b3)


def _reference_forward(x, params):
    """Pure-JAX f32 reference matching the PyTorch module."""
    w1, b1, w2, b2, w3, b3 = params
    a1 = jnp.maximum(x @ w1.T + b1[:, 0], 0.0)
    a2 = jnp.maximum(a1 @ w2.T + b2[:, 0], 0.0)
    return jax.nn.sigmoid(a2 @ w3.T + b3[:, 0])[:, 0]


if __name__ == "__main__":
    key = jax.random.PRNGKey(0)
    k_x, k_p = jax.random.split(key)

    batch = 8
    input_size = 32  # stands in for the TF-IDF feature dimension

    x = jax.random.normal(k_x, (batch, input_size), dtype=jnp.float32)
    params = init_params(k_p, input_size, h1=20, h2=20)

    y = neural_network_forward(x, params)
    jax.block_until_ready(y)

    y_ref = _reference_forward(x, params)

    assert y.shape == (batch,), y.shape
    assert bool(jnp.all(jnp.isfinite(y)))
    assert bool(jnp.all((y >= 0.0) & (y <= 1.0)))
    # f32 end to end; tolerance covers MXU default-precision matmul differences.
    assert bool(jnp.max(jnp.abs(y - y_ref)) < 2e-2), jnp.max(jnp.abs(y - y_ref))

    print("KERNEL_OK")
</pallas_src>

<mosaic_0001>
module attributes {stable_mosaic.version = 11 : i64} {
  func.func @_mlp_kernel(%arg0: i32, %arg1: memref<128x32xf32, #tpu.memory_space<vmem>>, %arg2: memref<20x32xf32, #tpu.memory_space<vmem>>, %arg3: memref<20x1xf32, #tpu.memory_space<vmem>>, %arg4: memref<20x20xf32, #tpu.memory_space<vmem>>, %arg5: memref<20x1xf32, #tpu.memory_space<vmem>>, %arg6: memref<1x20xf32, #tpu.memory_space<vmem>>, %arg7: memref<1x1xf32, #tpu.memory_space<vmem>>, %arg8: memref<1x128xf32, #tpu.memory_space<vmem>>) attributes {dimension_semantics = [#tpu.dimension_semantics<parallel>], iteration_bounds = array<i64: 1>, scalar_prefetch = 0 : i64, scratch_operands = 0 : i64, tpu.core_type = #tpu.core_type<tc>, window_params = [{transform_indices = @transform_0, window_bounds = array<i64: 128, 32>}, {pipeline_mode = #tpu.pipeline_mode<synchronous>, transform_indices = @transform_1, window_bounds = array<i64: 20, 32>}, {pipeline_mode = #tpu.pipeline_mode<synchronous>, transform_indices = @transform_2, window_bounds = array<i64: 20, 1>}, {pipeline_mode = #tpu.pipeline_mode<synchronous>, transform_indices = @transform_3, window_bounds = array<i64: 20, 20>}, {pipeline_mode = #tpu.pipeline_mode<synchronous>, transform_indices = @transform_4, window_bounds = array<i64: 20, 1>}, {pipeline_mode = #tpu.pipeline_mode<synchronous>, transform_indices = @transform_5, window_bounds = array<i64: 1, 20>}, {pipeline_mode = #tpu.pipeline_mode<synchronous>, transform_indices = @transform_6, window_bounds = array<i64: 1, 1>}, {transform_indices = @transform_7, window_bounds = array<i64: 1, 128>}]} {
    %c0 = arith.constant 0 : index
    %c0_0 = arith.constant 0 : index
    %0 = vector.load %arg1[%c0, %c0_0] : memref<128x32xf32, #tpu.memory_space<vmem>>, vector<128x32xf32>
    %c0_1 = arith.constant 0 : index
    %c0_2 = arith.constant 0 : index
    %1 = vector.load %arg2[%c0_1, %c0_2] : memref<20x32xf32, #tpu.memory_space<vmem>>, vector<20x32xf32>
    %cst = arith.constant dense<0.000000e+00> : vector<20x128xf32>
    %2 = tpu.matmul %1, %0, %cst {dimension_numbers = #tpu.dot_dimension_numbers<[1], [1], [0], [0], [0, 0, 1, 0], [], []>} : vector<20x32xf32>, vector<128x32xf32>, vector<20x128xf32> -> vector<20x128xf32>
    %c0_3 = arith.constant 0 : index
    %c0_4 = arith.constant 0 : index
    %3 = vector.load %arg3[%c0_3, %c0_4] : memref<20x1xf32, #tpu.memory_space<vmem>>, vector<20x1xf32>
    %4 = vector.broadcast %3 : vector<20x1xf32> to vector<20x128xf32>
    %5 = arith.addf %2, %4 : vector<20x128xf32>
    %cst_5 = arith.constant 0.000000e+00 : f32
    %6 = vector.broadcast %cst_5 : f32 to vector<20x128xf32>
    %7 = arith.maximumf %5, %6 : vector<20x128xf32>
    %c0_6 = arith.constant 0 : index
    %c0_7 = arith.constant 0 : index
    %8 = vector.load %arg4[%c0_6, %c0_7] : memref<20x20xf32, #tpu.memory_space<vmem>>, vector<20x20xf32>
    %cst_8 = arith.constant dense<0.000000e+00> : vector<20x128xf32>
    %9 = tpu.matmul %8, %7, %cst_8 {dimension_numbers = #tpu.dot_dimension_numbers<[1], [0], [0], [1], [0, 0, 1, 1], [], []>} : vector<20x20xf32>, vector<20x128xf32>, vector<20x128xf32> -> vector<20x128xf32>
    %c0_9 = arith.constant 0 : index
    %c0_10 = arith.constant 0 : index
    %10 = vector.load %arg5[%c0_9, %c0_10] : memref<20x1xf32, #tpu.memory_space<vmem>>, vector<20x1xf32>
    %11 = vector.broadcast %10 : vector<20x1xf32> to vector<20x128xf32>
    %12 = arith.addf %9, %11 : vector<20x128xf32>
    %cst_11 = arith.constant 0.000000e+00 : f32
    %13 = vector.broadcast %cst_11 : f32 to vector<20x128xf32>
    %14 = arith.maximumf %12, %13 : vector<20x128xf32>
    %c0_12 = arith.constant 0 : index
    %c0_13 = arith.constant 0 : index
    %15 = vector.load %arg6[%c0_12, %c0_13] : memref<1x20xf32, #tpu.memory_space<vmem>>, vector<1x20xf32>
    %cst_14 = arith.constant dense<0.000000e+00> : vector<1x128xf32>
    %16 = tpu.matmul %15, %14, %cst_14 {dimension_numbers = #tpu.dot_dimension_numbers<[1], [0], [0], [1], [0, 0, 1, 1], [], []>} : vector<1x20xf32>, vector<20x128xf32>, vector<1x128xf32> -> vector<1x128xf32>
    %c0_15 = arith.constant 0 : index
    %c0_16 = arith.constant 0 : index
    %17 = vector.load %arg7[%c0_15, %c0_16] : memref<1x1xf32, #tpu.memory_space<vmem>>, vector<1x1xf32>
    %18 = vector.broadcast %17 : vector<1x1xf32> to vector<1x128xf32>
    %19 = arith.addf %16, %18 : vector<1x128xf32>
    %cst_17 = arith.constant 0.000000e+00 : f32
    %20 = vector.broadcast %cst_17 : f32 to vector<1x128xf32>
    %21 = arith.subf %20, %19 : vector<1x128xf32>
    %22 = math.exp %21 : vector<1x128xf32>
    %cst_18 = arith.constant 1.000000e+00 : f32
    %23 = vector.broadcast %cst_18 : f32 to vector<1x128xf32>
    %24 = arith.addf %23, %22 : vector<1x128xf32>
    %cst_19 = arith.constant 1.000000e+00 : f32
    %25 = vector.broadcast %cst_19 : f32 to vector<1x128xf32>
    %26 = arith.divf %25, %24 : vector<1x128xf32>
    %c0_20 = arith.constant 0 : index
    %c0_21 = arith.constant 0 : index
    %27 = vector.load %arg8[%c0_20, %c0_21] : memref<1x128xf32, #tpu.memory_space<vmem>>, vector<1x128xf32>
    tpu.vector_store %arg8[%c0_20, %c0_21], %26 {strides = array<i32>} : memref<1x128xf32, #tpu.memory_space<vmem>>, vector<1x128xf32>,
    return
  }
  func.func @transform_0(%arg0: i32) -> (i32, i32) {
    %c0_i32 = arith.constant 0 : i32
    %c0_i32_0 = arith.constant 0 : i32
    return %arg0, %c0_i32 : i32, i32
  }
  func.func @transform_1(%arg0: i32) -> (i32, i32) {
    %c0_i32 = arith.constant 0 : i32
    %c0_i32_0 = arith.constant 0 : i32
    %c0_i32_1 = arith.constant 0 : i32
    return %c0_i32, %c0_i32_0 : i32, i32
  }
  func.func @transform_2(%arg0: i32) -> (i32, i32) {
    %c0_i32 = arith.constant 0 : i32
    %c0_i32_0 = arith.constant 0 : i32
    %c0_i32_1 = arith.constant 0 : i32
    return %c0_i32, %c0_i32_0 : i32, i32
  }
  func.func @transform_3(%arg0: i32) -> (i32, i32) {
    %c0_i32 = arith.constant 0 : i32
    %c0_i32_0 = arith.constant 0 : i32
    %c0_i32_1 = arith.constant 0 : i32
    return %c0_i32, %c0_i32_0 : i32, i32
  }
  func.func @transform_4(%arg0: i32) -> (i32, i32) {
    %c0_i32 = arith.constant 0 : i32
    %c0_i32_0 = arith.constant 0 : i32
    %c0_i32_1 = arith.constant 0 : i32
    return %c0_i32, %c0_i32_0 : i32, i32
  }
  func.func @transform_5(%arg0: i32) -> (i32, i32) {
    %c0_i32 = arith.constant 0 : i32
    %c0_i32_0 = arith.constant 0 : i32
    %c0_i32_1 = arith.constant 0 : i32
    return %c0_i32, %c0_i32_0 : i32, i32
  }
  func.func @transform_6(%arg0: i32) -> (i32, i32) {
    %c0_i32 = arith.constant 0 : i32
    %c0_i32_0 = arith.constant 0 : i32
    %c0_i32_1 = arith.constant 0 : i32
    return %c0_i32, %c0_i32_0 : i32, i32
  }
  func.func @transform_7(%arg0: i32) -> (i32, i32) {
    %c0_i32 = arith.constant 0 : i32
    %c0_i32_0 = arith.constant 0 : i32
    return %c0_i32, %arg0 : i32, i32
  }
}

</mosaic_0001>

<llo_original>
// kernel: neural_network_forward.1
$region0: #{neural_network_forward.1}
  #allocation0 [shape = 'u32[]', space=smem, size = 0x4, offset = 0x4, fixed_abs, tag = 'smem constant byte address 0x4 - core index']
  #allocation1 [shape = 'u32[72,128]{1,0:T(1,128)}', space=vmem, size = 0x9000, scoped, tag = 'internal scratch']
  #allocation2 [shape = 'f32[1,1]{1,0:T(1,128)S(1)}', space=vmem, size = 0x200, scoped, tag = 'scoped memory for neural_network_forward.1']
  %s0 = inlined_call_operand.vmem [shape: f32[128,32], index: 0, kind: input, shape index: {}]
  %s1 = inlined_call_operand.vmem [shape: f32[20,32], index: 1, kind: input, shape index: {}]
  %s2 = inlined_call_operand.vmem [shape: f32[20,1], index: 2, kind: input, shape index: {}]
  %s3 = inlined_call_operand.vmem [shape: f32[20,20], index: 3, kind: input, shape index: {}]
  %s4 = inlined_call_operand.vmem [shape: f32[20,1], index: 4, kind: input, shape index: {}]
  %s5 = inlined_call_operand.vmem [shape: f32[1,20], index: 5, kind: input, shape index: {}]
  %s6 = inlined_call_operand.<no memory space> [shape: f32[1,1], index: 6, kind: input, shape index: {}]
  %s7 = inlined_call_operand.vmem [shape: f32[1,128], index: 7, kind: output, shape index: {}]
  %s8 = sld [smem:[#allocation0]]
  $region38: #{neural_network_forward.1} parent=0
    _
  %s10 = ssub.s32 1, %s8
  %s11 = scalar_select 0, %s10, %s8
  %v12 = vstv %s6
  %13 = vst [vmem:[#allocation2] sm:$0x1] %v12
  // Predicated region
  $region2: #{neural_network_forward.1} parent=0 // pred_check
    _
  $region3: #{neural_network_forward.1} parent=0 // pred_check_branch
    %15 = sbr.rel (0) target = $region5
  $region4: #{neural_network_forward.1} parent=0 // pred_region
    _
  $region5: #{neural_network_forward.1} parent=0 // pred_fallthru
    _
  // Predicated region
  $region6: #{neural_network_forward.1} parent=0 // pred_check
    _
  $region7: #{neural_network_forward.1} parent=0 // pred_check_branch
    %17 = sbr.rel (0) target = $region9
  $region8: #{neural_network_forward.1} parent=0 // pred_region
    _
  $region9: #{neural_network_forward.1} parent=0 // pred_fallthru
    _
  // Predicated region
  $region10: #{neural_network_forward.1} parent=0 // pred_check
    _
  $region11: #{neural_network_forward.1} parent=0 // pred_check_branch
    %19 = sbr.rel (0) target = $region13
  $region12: #{neural_network_forward.1} parent=0 // pred_region
    _
  $region13: #{neural_network_forward.1} parent=0 // pred_fallthru
    _
  // Predicated region
  $region14: #{neural_network_forward.1} parent=0 // pred_check
    _
  $region15: #{neural_network_forward.1} parent=0 // pred_check_branch
    %21 = sbr.rel (0) target = $region17
  $region16: #{neural_network_forward.1} parent=0 // pred_region
    _
  $region17: #{neural_network_forward.1} parent=0 // pred_fallthru
    _
  // Predicated region
  $region18: #{neural_network_forward.1} parent=0 // pred_check
    _
  $region19: #{neural_network_forward.1} parent=0 // pred_check_branch
    %23 = sbr.rel (0) target = $region21
  $region20: #{neural_network_forward.1} parent=0 // pred_region
    _
  $region21: #{neural_network_forward.1} parent=0 // pred_fallthru
    _
  // Predicated region
  $region22: #{neural_network_forward.1} parent=0 // pred_check
    _
  $region23: #{neural_network_forward.1} parent=0 // pred_check_branch
    %25 = sbr.rel (0) target = $region25
  $region24: #{neural_network_forward.1} parent=0 // pred_region
    _
  $region25: #{neural_network_forward.1} parent=0 // pred_fallthru
    _
  // Predicated region
  $region26: #{neural_network_forward.1} parent=0 // pred_check
    _
  $region27: #{neural_network_forward.1} parent=0 // pred_check_branch
    %27 = sbr.rel (0) target = $region29
  $region28: #{neural_network_forward.1} parent=0 // pred_region
    _
  $region29: #{neural_network_forward.1} parent=0 // pred_fallthru
    _
  %v28 = vld [vmem:[%s0] sm:$0xff]
  %v29 = vld [vmem:[%s0 + $0x8] sm:$0xff]
  %v30 = vld [vmem:[%s0 + $0x10] sm:$0xff]
  %v31 = vld [vmem:[%s0 + $0x18] sm:$0xff]
  %v32 = vld [vmem:[%s0 + $0x20] sm:$0xff]
  %v33 = vld [vmem:[%s0 + $0x28] sm:$0xff]
  %v34 = vld [vmem:[%s0 + $0x30] sm:$0xff]
  %v35 = vld [vmem:[%s0 + $0x38] sm:$0xff]
  %v36 = vld [vmem:[%s0 + $0x40] sm:$0xff]
  %v37 = vld [vmem:[%s0 + $0x48] sm:$0xff]
  %v38 = vld [vmem:[%s0 + $0x50] sm:$0xff]
  %v39 = vld [vmem:[%s0 + $0x58] sm:$0xff]
  %v40 = vld [vmem:[%s0 + $0x60] sm:$0xff]
  %v41 = vld [vmem:[%s0 + $0x68] sm:$0xff]
  %v42 = vld [vmem:[%s0 + $0x70] sm:$0xff]
  %v43 = vld [vmem:[%s0 + $0x78] sm:$0xff]
  %v44 = vld [vmem:[%s1] sm:$0xff]
  %v45 = vld [vmem:[%s1 + $0x8] sm:$0xff]
  %v46 = vld [vmem:[%s1 + $0x10] sm:$0xf]
  %v47 = vld [vmem:[%s2] sm:$0xff]
  %v48 = vld [vmem:[%s2 + $0x8] sm:$0xff]
  %v49 = vld [vmem:[%s2 + $0x10] sm:$0xf]
  %51 = vset.pattern.permute.xlu0 0
  %52 = vperm.xlu0 %51, %v47
  %v53 = vpop.permute.xlu0 %52
  %56 = vset.pattern.permute.xlu0 0
  %57 = vperm.xlu0 %56, %v48
  %v58 = vpop.permute.xlu0 %57
  %61 = vset.pattern.permute.xlu0 0
  %62 = vperm.xlu0 %61, %v49
  %v63 = vpop.permute.xlu0 %62
  %vm65 = vcmask 261120
  %v67 = vsel %vm65, %v44, 0
  %v70 = vsel %vm65, %v45, 0
  %v73 = vsel %vm65, %v46, 0
  %v76 = vsel %vm65, %v28, 0
  %v79 = vsel %vm65, %v29, 0
  %v82 = vsel %vm65, %v30, 0
  %v85 = vsel %vm65, %v31, 0
  %v88 = vsel %vm65, %v32, 0
  %v91 = vsel %vm65, %v33, 0
  %v94 = vsel %vm65, %v34, 0
  %v97 = vsel %vm65, %v35, 0
  %v100 = vsel %vm65, %v36, 0
  %v103 = vsel %vm65, %v37, 0
  %v106 = vsel %vm65, %v38, 0
  %v109 = vsel %vm65, %v39, 0
  %v112 = vsel %vm65, %v40, 0
  %v115 = vsel %vm65, %v41, 0
  %v118 = vsel %vm65, %v42, 0
  %v121 = vsel %vm65, %v43, 0
  %123 = vmatpush.xpose.msra.mxu0 %v121
  %124 = vmatpush.xpose.msra.mxu0 %v118
  %125 = vmatpush.xpose.msra.mxu0 %v115
  %126 = vmatpush.xpose.msra.mxu0 %v112
  %127 = vmatpush.xpose.msra.mxu0 %v109
  %128 = vmatpush.xpose.msra.mxu0 %v106
  %129 = vmatpush.xpose.msra.mxu0 %v103
  %130 = vmatpush.xpose.msra.mxu0 %v100
  %131 = vmatpush.xpose.msra.mxu0 %v97
  %132 = vmatpush.xpose.msra.mxu0 %v94
  %133 = vmatpush.xpose.msra.mxu0 %v91
  %134 = vmatpush.xpose.msra.mxu0 %v88
  %135 = vmatpush.xpose.msra.mxu0 %v85
  %136 = vmatpush.xpose.msra.mxu0 %v82
  %137 = vmatpush.xpose.msra.mxu0 %v79
  %138 = vmatpush.xpose.msra.mxu0 %v76
  %139 = vmatmul.f32.gmra.mxu0 %v67
  %v140 = vpop.f32.mrf.mxu0
  %v141 = vadd.f32 %v53, %v140
  %142 = vmatmul.f32.gmra.mxu0 %v70
  %v143 = vpop.f32.mrf.mxu0
  %v144 = vadd.f32 %v58, %v143
  %145 = vmatmul.f32.gmra.mxu0 %v73
  %v146 = vpop.f32.mrf.mxu0
  %v147 = vadd.f32 %v63, %v146
  %148 = vdwg.mxu0
  %v149 = vmax.f32 %v141, 0.0
  %v150 = vmax.f32 %v144, 0.0
  %v151 = vmax.f32 %v147, 0.0
  %v152 = vld [vmem:[%s3] sm:$0xff]
  %v153 = vld [vmem:[%s3 + $0x8] sm:$0xff]
  %v154 = vld [vmem:[%s3 + $0x10] sm:$0xf]
  %v155 = vld [vmem:[%s4] sm:$0xff]
  %v156 = vld [vmem:[%s4 + $0x8] sm:$0xff]
  %v157 = vld [vmem:[%s4 + $0x10] sm:$0xf]
  %159 = vset.pattern.permute.xlu0 0
  %160 = vperm.xlu0 %159, %v155
  %v161 = vpop.permute.xlu0 %160
  %164 = vset.pattern.permute.xlu0 0
  %165 = vperm.xlu0 %164, %v156
  %v166 = vpop.permute.xlu0 %165
  %169 = vset.pattern.permute.xlu0 0
  %170 = vperm.xlu0 %169, %v157
  %v171 = vpop.permute.xlu0 %170
  %vm173 = vcmask 162816
  %v175 = vsel %vm173, %v152, 0
  %v178 = vsel %vm173, %v153, 0
  %v181 = vsel %vm173, %v154, 0
  %vm183 = vcmask 1043456
  %v185 = vsel %vm183, %v151, 0
  %187 = vmatpush.msra.mxu0 0.0
  %188 = vmatpush.msra.mxu0 0.0
  %189 = vmatpush.msra.mxu0 0.0
  %190 = vmatpush.msra.mxu0 0.0
  %191 = vmatpush.msra.mxu0 0.0
  %192 = vmatpush.msra.mxu0 0.0
  %193 = vmatpush.msra.mxu0 0.0
  %194 = vmatpush.msra.mxu0 0.0
  %195 = vmatpush.msra.mxu0 0.0
  %196 = vmatpush.msra.mxu0 0.0
  %197 = vmatpush.msra.mxu0 0.0
  %198 = vmatpush.msra.mxu0 0.0
  %199 = vmatpush.msra.mxu0 0.0
  %200 = vmatpush.msra.mxu0 %v185
  %201 = vmatpush.msra.mxu0 %v150
  %202 = vmatpush.msra.mxu0 %v149
  %203 = vmatmul.f32.gmra.mxu0 %v175
  %v204 = vpop.f32.mrf.mxu0
  %v205 = vadd.f32 %v161, %v204
  %206 = vmatmul.f32.gmra.mxu0 %v178
  %v207 = vpop.f32.mrf.mxu0
  %v208 = vadd.f32 %v166, %v207
  %209 = vmatmul.f32.gmra.mxu0 %v181
  %v210 = vpop.f32.mrf.mxu0
  %v211 = vadd.f32 %v171, %v210
  %212 = vdwg.mxu0
  %v213 = vmax.f32 %v205, 0.0
  %v214 = vmax.f32 %v208, 0.0
  %v215 = vmax.f32 %v211, 0.0
  %v216 = vld [vmem:[%s5] sm:$0x1]
  %v217 = vld [vmem:[#allocation2] sm:$0x1]
  %219 = vset.pattern.permute.xlu0 0
  %220 = vperm.xlu0 %219, %v217
  %v221 = vpop.permute.xlu0 %220
  %v223 = vperm.slane %v221, 0
  %v225 = vsel %vm173, %v216, 0
  %v228 = vsel %vm183, %v215, 0
  %230 = vmatpush.msra.mxu0 0.0
  %231 = vmatpush.msra.mxu0 0.0
  %232 = vmatpush.msra.mxu0 0.0
  %233 = vmatpush.msra.mxu0 0.0
  %234 = vmatpush.msra.mxu0 0.0
  %235 = vmatpush.msra.mxu0 0.0
  %236 = vmatpush.msra.mxu0 0.0
  %237 = vmatpush.msra.mxu0 0.0
  %238 = vmatpush.msra.mxu0 0.0
  %239 = vmatpush.msra.mxu0 0.0
  %240 = vmatpush.msra.mxu0 0.0
  %241 = vmatpush.msra.mxu0 0.0
  %242 = vmatpush.msra.mxu0 0.0
  %243 = vmatpush.msra.mxu0 %v228
  %244 = vmatpush.msra.mxu0 %v214
  %245 = vmatpush.msra.mxu0 %v213
  %246 = vmatmul.f32.gmra.mxu0 %v225
  %v247 = vpop.f32.mrf.mxu0
  %v248 = vadd.f32 %v223, %v247
  %249 = vdwg.mxu0
  %v250 = vsub.f32 0.0, %v248
  %v251 = vmul.f32 %v250, 1.442695
  %v252 = vpow.pop %v251
  %v253 = vadd.f32 %v252, 1.0
  %v254 = vrcp.pop %v253
  %v255 = vmul.f32 %v253, %v254
  %v256 = vsub.f32 1.0, %v255
  %v257 = vmul.f32 %v254, %v256
  %v258 = vadd.f32 %v254, %v257
  %vm259 = vweird.f32 %v253
  %vm260 = vweird.f32 %v254
  %vm261 = vmor %vm259, %vm260
  %v262 = vsel %vm261, %v254, %v258
  %v263 = vand.u32 2147483647, %v253
  %vm264 = vcmp.eq.f32.partialorder %v263, 8.507059e+37
  %v265 = vand.u32 %v253, 2147483648
  %v266 = vor.u32 1.1754944e-38, %v265
  %v267 = vsel %vm264, %v266, %v262
  %v268 = vmul.f32 1.0, %v267
  %269 = vst [vmem:[%s7] sm:$0x1] %v268
  // Predicated region
  $region30: #{neural_network_forward.1} parent=0 // pred_check
    _
  $region31: #{neural_network_forward.1} parent=0 // pred_check_branch
    %271 = sbr.rel (0) target = $region33
  $region32: #{neural_network_forward.1} parent=0 // pred_region
    _
  $region33: #{neural_network_forward.1} parent=0 // pred_fallthru
    _
  // Predicated region
  $region34: #{neural_network_forward.1} parent=0 // pred_check
    _
  $region35: #{neural_network_forward.1} parent=0 // pred_check_branch
    %273 = sbr.rel (0) target = $region37
  $region36: #{neural_network_forward.1} parent=0 // pred_region
    _
  $region37: #{neural_network_forward.1} parent=0 // pred_fallthru
    _

</llo_original>
